<compile_context>
chip_gen: v7x
topology: tpu7x:2x2x1
jax: 0.10.0
libtpu: 0.0.40
codegen_flags: <defaults>
</compile_context>

<pallas_src>
import functools

import jax
import jax.numpy as jnp
from jax.experimental import pallas as pl
from jax.experimental.pallas import tpu as pltpu

BN_EPS = 1e-5
LEAKY_SLOPE = 0.01


def _round_up(n, m):
    return ((n + m - 1) // m) * m


def _disc_kernel(x_ref, w1_ref, b1_ref, gamma_ref, beta_ref, w2_ref, b2_ref,
                 o_ref, sum_ref, sq_ref, *, bm, n_valid):
    p = pl.program_id(0)   # 0: accumulate BN stats, 1: normalize + project
    i = pl.program_id(1)   # batch-tile index

    # Hidden layer for this batch tile: (BM, K) @ (K, W) on the MXU,
    # bf16 inputs / f32 accumulation, then bias + LeakyReLU (VPU).
    h = jnp.dot(x_ref[...], w1_ref[...], preferred_element_type=jnp.float32)
    h = h + b1_ref[...]
    h = jnp.where(h >= 0, h, LEAKY_SLOPE * h)            # (BM, W) f32

    @pl.when(p == 0)
    def _accumulate_stats():
        @pl.when(i == 0)
        def _init():
            sum_ref[...] = jnp.zeros_like(sum_ref)
            sq_ref[...] = jnp.zeros_like(sq_ref)

        # Mask batch-padding rows so they do not pollute the statistics.
        row = i * bm + jax.lax.broadcasted_iota(jnp.int32, (bm, 1), 0)
        hm = jnp.where(row < n_valid, h, 0.0)
        sum_ref[...] += jnp.sum(hm, axis=0, keepdims=True)
        sq_ref[...] += jnp.sum(hm * hm, axis=0, keepdims=True)
        # Output tile is meaningless in phase 0; keep its writeback deterministic.
        o_ref[...] = jnp.zeros_like(o_ref)

    @pl.when(p == 1)
    def _normalize_and_project():
        inv_n = 1.0 / n_valid
        mean = sum_ref[...] * inv_n                       # (1, W)
        var = sq_ref[...] * inv_n - mean * mean           # biased var (training BN)
        inv_std = jax.lax.rsqrt(var + BN_EPS)             # EUP rsqrt
        g = gamma_ref[...]                                # (1, W)
        w2row = w2_ref[...]                               # (1, W) = out_layer.weight
        # Fold BN affine + output weight:  out = h @ s + c
        s = inv_std * g * w2row                           # (1, W)
        c = jnp.sum((beta_ref[...] - mean * inv_std * g) * w2row,
                    axis=-1, keepdims=True) + b2_ref[...]  # (1, 1)
        # Transposed contraction over W -> lane-dense (1, BM) output block
        # (avoids an N=1 matmul and a last-dim-1 masked store).
        out = jax.lax.dot_general(s, h, (((1,), (1,)), ((), ())),
                                  preferred_element_type=jnp.float32)
        o_ref[...] = (out + c).astype(o_ref.dtype)


def ful_discriminator_forward(x, w1, b1, gamma, beta, w2, b2,
                              *, block_m=512, use_bf16=True):
    """x: (B, kb_dim) f32. Weights pre-transposed: w1 (K, W), w2 (W, 1).
    Returns (B, 1) f32 — training-mode forward of Ful_Discriminator."""
    B, K = x.shape
    W = w1.shape[1]
    assert w1.shape == (K, W) and w2.shape == (W, 1)
    assert b1.shape == (W,) and gamma.shape == (W,) and beta.shape == (W,)
    assert b2.shape == (1,)

    # Batch tile: multiple of 8 (sublane); a multiple of 128 whenever tiling is
    # actually needed so the lane-dense output block stays aligned.
    if B <= block_m:
        bm = _round_up(B, 8)
    else:
        bm = block_m
    b_pad = _round_up(B, bm)
    nb = b_pad // bm

    in_dtype = jnp.bfloat16 if use_bf16 else jnp.float32
    x_p = jnp.pad(x.astype(in_dtype), ((0, b_pad - B), (0, 0)))
    w1_c = w1.astype(in_dtype)

    b1_2d = b1.reshape(1, W).astype(jnp.float32)
    gamma_2d = gamma.reshape(1, W).astype(jnp.float32)
    beta_2d = beta.reshape(1, W).astype(jnp.float32)
    w2_row = w2.reshape(1, W).astype(jnp.float32)
    b2_2d = b2.reshape(1, 1).astype(jnp.float32)

    kernel = functools.partial(_disc_kernel, bm=bm, n_valid=B)

    out_rows = pl.pallas_call(
        kernel,
        out_shape=jax.ShapeDtypeStruct((1, b_pad), jnp.float32),
        grid_spec=pltpu.PrefetchScalarGridSpec(
            num_scalar_prefetch=0,
            grid=(2, nb),                                     # (phase, batch tile)
            in_specs=[
                pl.BlockSpec((bm, K), lambda p, i: (i, 0)),   # x tile (pipelined)
                pl.BlockSpec((K, W), lambda p, i: (0, 0)),    # w1 (resident)
                pl.BlockSpec((1, W), lambda p, i: (0, 0)),    # b1
                pl.BlockSpec((1, W), lambda p, i: (0, 0)),    # gamma
                pl.BlockSpec((1, W), lambda p, i: (0, 0)),    # beta
                pl.BlockSpec((1, W), lambda p, i: (0, 0)),    # w2 row
                pl.BlockSpec((1, 1), lambda p, i: (0, 0)),    # b2
            ],
            out_specs=pl.BlockSpec((1, bm), lambda p, i: (0, i)),  # lane-dense
            scratch_shapes=[pltpu.VMEM((1, W), jnp.float32),       # sum(h)
                            pltpu.VMEM((1, W), jnp.float32)],      # sum(h^2)
        ),
        compiler_params=pltpu.CompilerParams(
            # Stats carry across both axes -> sequential execution required.
            dimension_semantics=("arbitrary", "arbitrary"),
            vmem_limit_bytes=32 * 1024 * 1024,
        ),
    )(x_p, w1_c, b1_2d, gamma_2d, beta_2d, w2_row, b2_2d)

    # (1, B_pad) lane-dense kernel output -> (B, 1) module output.
    return out_rows[0, :B].reshape(B, 1)


def _reference(x, w1, b1, gamma, beta, w2, b2, use_bf16=True):
    if use_bf16:
        x = x.astype(jnp.bfloat16)
        w1 = w1.astype(jnp.bfloat16)
    h = jnp.dot(x, w1, preferred_element_type=jnp.float32) + b1.reshape(1, -1)
    h = jnp.where(h >= 0, h, LEAKY_SLOPE * h)
    mean = h.mean(axis=0, keepdims=True)
    var = ((h - mean) ** 2).mean(axis=0, keepdims=True)
    hn = (h - mean) * jax.lax.rsqrt(var + BN_EPS) * gamma.reshape(1, -1) \
        + beta.reshape(1, -1)
    return hn @ w2 + b2.reshape(1, 1)


if __name__ == "__main__":
    KB_DIM, WIDTH = 32, 64
    key = jax.random.PRNGKey(0)
    k_p, k_x1, k_x2 = jax.random.split(key, 3)

    # Deterministic xavier-normal-ish init (matches the module's initial()).
    k_w1, k_b1, k_w2, k_b2 = jax.random.split(k_p, 4)

    def xavier(k, fan_in, fan_out, shape):
        std = (2.0 / (fan_in + fan_out)) ** 0.5
        return std * jax.random.normal(k, shape, dtype=jnp.float32)

    w1 = xavier(k_w1, KB_DIM, WIDTH, (KB_DIM, WIDTH))     # hid_layer.weight^T
    b1 = 0.01 * jax.random.normal(k_b1, (WIDTH,), dtype=jnp.float32)
    w2 = xavier(k_w2, WIDTH, 1, (WIDTH, 1))               # out_layer.weight^T
    b2 = 0.01 * jax.random.normal(k_b2, (1,), dtype=jnp.float32)
    gamma = jnp.ones((WIDTH,), dtype=jnp.float32)         # BN affine defaults
    beta = jnp.zeros((WIDTH,), dtype=jnp.float32)
    params = (w1, b1, gamma, beta, w2, b2)

    # Case 1: multiple batch tiles — exercises cross-tile BN stat accumulation
    # and the lane-dense tiled output.
    B1 = 256
    x1 = jax.random.normal(k_x1, (B1, KB_DIM), dtype=jnp.float32)
    out1 = jax.block_until_ready(
        ful_discriminator_forward(x1, *params, block_m=128))
    ref1 = _reference(x1, *params)
    assert out1.shape == (B1, 1)
    assert jnp.allclose(out1, ref1, atol=5e-3, rtol=5e-3), \
        float(jnp.max(jnp.abs(out1 - ref1)))

    # Case 2: small batch that is not a multiple of 8 — exercises the
    # padded-row masking in the statistics pass.
    B2 = 50
    x2 = jax.random.normal(k_x2, (B2, KB_DIM), dtype=jnp.float32)
    out2 = jax.block_until_ready(ful_discriminator_forward(x2, *params))
    ref2 = _reference(x2, *params)
    assert out2.shape == (B2, 1)
    assert jnp.allclose(out2, ref2, atol=5e-3, rtol=5e-3), \
        float(jnp.max(jnp.abs(out2 - ref2)))

    print("KERNEL_OK")
</pallas_src>

<mosaic_0001>
module attributes {stable_mosaic.version = 11 : i64} {
  func.func @_disc_kernel(%arg0: i32, %arg1: i32, %arg2: memref<128x32xbf16, #tpu.memory_space<vmem>>, %arg3: memref<32x64xbf16, #tpu.memory_space<vmem>>, %arg4: memref<1x64xf32, #tpu.memory_space<vmem>>, %arg5: memref<1x64xf32, #tpu.memory_space<vmem>>, %arg6: memref<1x64xf32, #tpu.memory_space<vmem>>, %arg7: memref<1x64xf32, #tpu.memory_space<vmem>>, %arg8: memref<1x1xf32, #tpu.memory_space<vmem>>, %arg9: memref<1x128xf32, #tpu.memory_space<vmem>>, %arg10: memref<1x64xf32, #tpu.memory_space<vmem>>, %arg11: memref<1x64xf32, #tpu.memory_space<vmem>>) attributes {dimension_semantics = [#tpu.dimension_semantics<arbitrary>, #tpu.dimension_semantics<arbitrary>], iteration_bounds = array<i64: 2, 2>, scalar_prefetch = 0 : i64, scratch_operands = 2 : i64, tpu.core_type = #tpu.core_type<tc>, window_params = [{transform_indices = @transform_0, window_bounds = array<i64: 128, 32>}, {pipeline_mode = #tpu.pipeline_mode<synchronous>, transform_indices = @transform_1, window_bounds = array<i64: 32, 64>}, {pipeline_mode = #tpu.pipeline_mode<synchronous>, transform_indices = @transform_2, window_bounds = array<i64: 1, 64>}, {pipeline_mode = #tpu.pipeline_mode<synchronous>, transform_indices = @transform_3, window_bounds = array<i64: 1, 64>}, {pipeline_mode = #tpu.pipeline_mode<synchronous>, transform_indices = @transform_4, window_bounds = array<i64: 1, 64>}, {pipeline_mode = #tpu.pipeline_mode<synchronous>, transform_indices = @transform_5, window_bounds = array<i64: 1, 64>}, {pipeline_mode = #tpu.pipeline_mode<synchronous>, transform_indices = @transform_6, window_bounds = array<i64: 1, 1>}, {transform_indices = @transform_7, window_bounds = array<i64: 1, 128>}]} {
    %c0 = arith.constant 0 : index
    %c0_0 = arith.constant 0 : index
    %0 = vector.load %arg2[%c0, %c0_0] : memref<128x32xbf16, #tpu.memory_space<vmem>>, vector<128x32xbf16>
    %c0_1 = arith.constant 0 : index
    %c0_2 = arith.constant 0 : index
    %1 = vector.load %arg3[%c0_1, %c0_2] : memref<32x64xbf16, #tpu.memory_space<vmem>>, vector<32x64xbf16>
    %cst = arith.constant dense<0.000000e+00> : vector<128x64xf32>
    %2 = tpu.matmul %0, %1, %cst {dimension_numbers = #tpu.dot_dimension_numbers<[1], [0], [0], [1], [0, 0, 1, 1], [], []>} : vector<128x32xbf16>, vector<32x64xbf16>, vector<128x64xf32> -> vector<128x64xf32>
    %c0_3 = arith.constant 0 : index
    %c0_4 = arith.constant 0 : index
    %3 = vector.load %arg4[%c0_3, %c0_4] : memref<1x64xf32, #tpu.memory_space<vmem>>, vector<1x64xf32>
    %4 = vector.broadcast %3 : vector<1x64xf32> to vector<128x64xf32>
    %5 = arith.addf %2, %4 : vector<128x64xf32>
    %cst_5 = arith.constant 0.000000e+00 : f32
    %6 = vector.broadcast %cst_5 : f32 to vector<128x64xf32>
    %7 = arith.cmpf oge, %5, %6 : vector<128x64xf32>
    %cst_6 = arith.constant 0.00999999977 : f32
    %8 = vector.broadcast %cst_6 : f32 to vector<128x64xf32>
    %9 = arith.mulf %8, %5 : vector<128x64xf32>
    %10 = arith.select %7, %5, %9 : vector<128x64xi1>, vector<128x64xf32>
    %c0_i32 = arith.constant 0 : i32
    %11 = arith.cmpi eq, %arg0, %c0_i32 : i32
    %12 = arith.extui %11 : i1 to i32
    %c0_i32_7 = arith.constant 0 : i32
    %13 = arith.cmpi ne, %12, %c0_i32_7 : i32
    scf.if %13 {
      %c0_i32_9 = arith.constant 0 : i32
      %17 = arith.cmpi eq, %arg1, %c0_i32_9 : i32
      %18 = arith.extui %17 : i1 to i32
      %c0_i32_10 = arith.constant 0 : i32
      %19 = arith.cmpi ne, %18, %c0_i32_10 : i32
      scf.if %19 {
        %cst_25 = arith.constant 0.000000e+00 : f32
        %43 = vector.broadcast %cst_25 : f32 to vector<1x64xf32>
        %c0_26 = arith.constant 0 : index
        %c0_27 = arith.constant 0 : index
        %44 = vector.load %arg10[%c0_26, %c0_27] : memref<1x64xf32, #tpu.memory_space<vmem>>, vector<1x64xf32>
        tpu.vector_store %arg10[%c0_26, %c0_27], %43 {strides = array<i32>} : memref<1x64xf32, #tpu.memory_space<vmem>>, vector<1x64xf32>,
        %cst_28 = arith.constant 0.000000e+00 : f32
        %45 = vector.broadcast %cst_28 : f32 to vector<1x64xf32>
        %c0_29 = arith.constant 0 : index
        %c0_30 = arith.constant 0 : index
        %46 = vector.load %arg11[%c0_29, %c0_30] : memref<1x64xf32, #tpu.memory_space<vmem>>, vector<1x64xf32>
        tpu.vector_store %arg11[%c0_29, %c0_30], %45 {strides = array<i32>} : memref<1x64xf32, #tpu.memory_space<vmem>>, vector<1x64xf32>,
      } else {
      }
      %c128_i32 = arith.constant 128 : i32
      %20 = arith.muli %arg1, %c128_i32 : i32
      %21 = tpu.iota {dimensions = array<i32: 0>} : vector<128x1xi32>
      %22 = vector.broadcast %20 : i32 to vector<128x1xi32>
      %23 = arith.addi %22, %21 : vector<128x1xi32>
      %c256_i32 = arith.constant 256 : i32
      %24 = vector.broadcast %c256_i32 : i32 to vector<128x1xi32>
      %25 = arith.cmpi slt, %23, %24 : vector<128x1xi32>
      %cst_11 = arith.constant 0.000000e+00 : f32
      %26 = vector.shape_cast %25 : vector<128x1xi1> to vector<128x1xi1>
      %27 = vector.broadcast %26 : vector<128x1xi1> to vector<128x64xi1>
      %28 = vector.broadcast %cst_11 : f32 to vector<128x64xf32>
      %29 = arith.select %27, %10, %28 : vector<128x64xi1>, vector<128x64xf32>
      %c0_12 = arith.constant 0 : index
      %c0_13 = arith.constant 0 : index
      %30 = vector.load %arg10[%c0_12, %c0_13] : memref<1x64xf32, #tpu.memory_space<vmem>>, vector<1x64xf32>
      %cst_14 = arith.constant dense<0.000000e+00> : vector<64xf32>
      %31 = vector.multi_reduction <add>, %29, %cst_14 [0] : vector<128x64xf32> to vector<64xf32>
      %32 = vector.shape_cast %31 : vector<64xf32> to vector<1x64xf32>
      %33 = arith.addf %30, %32 : vector<1x64xf32>
      %c0_15 = arith.constant 0 : index
      %c0_16 = arith.constant 0 : index
      %34 = vector.load %arg10[%c0_15, %c0_16] : memref<1x64xf32, #tpu.memory_space<vmem>>, vector<1x64xf32>
      tpu.vector_store %arg10[%c0_15, %c0_16], %33 {strides = array<i32>} : memref<1x64xf32, #tpu.memory_space<vmem>>, vector<1x64xf32>,
      %c0_17 = arith.constant 0 : index
      %c0_18 = arith.constant 0 : index
      %35 = vector.load %arg11[%c0_17, %c0_18] : memref<1x64xf32, #tpu.memory_space<vmem>>, vector<1x64xf32>
      %36 = arith.mulf %29, %29 : vector<128x64xf32>
      %cst_19 = arith.constant dense<0.000000e+00> : vector<64xf32>
      %37 = vector.multi_reduction <add>, %36, %cst_19 [0] : vector<128x64xf32> to vector<64xf32>
      %38 = vector.shape_cast %37 : vector<64xf32> to vector<1x64xf32>
      %39 = arith.addf %35, %38 : vector<1x64xf32>
      %c0_20 = arith.constant 0 : index
      %c0_21 = arith.constant 0 : index
      %40 = vector.load %arg11[%c0_20, %c0_21] : memref<1x64xf32, #tpu.memory_space<vmem>>, vector<1x64xf32>
      tpu.vector_store %arg11[%c0_20, %c0_21], %39 {strides = array<i32>} : memref<1x64xf32, #tpu.memory_space<vmem>>, vector<1x64xf32>,
      %cst_22 = arith.constant 0.000000e+00 : f32
      %41 = vector.broadcast %cst_22 : f32 to vector<1x128xf32>
      %c0_23 = arith.constant 0 : index
      %c0_24 = arith.constant 0 : index
      %42 = vector.load %arg9[%c0_23, %c0_24] : memref<1x128xf32, #tpu.memory_space<vmem>>, vector<1x128xf32>
      tpu.vector_store %arg9[%c0_23, %c0_24], %41 {strides = array<i32>} : memref<1x128xf32, #tpu.memory_space<vmem>>, vector<1x128xf32>,
    } else {
    }
    %c1_i32 = arith.constant 1 : i32
    %14 = arith.cmpi eq, %arg0, %c1_i32 : i32
    %15 = arith.extui %14 : i1 to i32
    %c0_i32_8 = arith.constant 0 : i32
    %16 = arith.cmpi ne, %15, %c0_i32_8 : i32
    scf.if %16 {
      %c0_9 = arith.constant 0 : index
      %c0_10 = arith.constant 0 : index
      %17 = vector.load %arg10[%c0_9, %c0_10] : memref<1x64xf32, #tpu.memory_space<vmem>>, vector<1x64xf32>
      %cst_11 = arith.constant 3.906250e-03 : f32
      %18 = vector.broadcast %cst_11 : f32 to vector<1x64xf32>
      %19 = arith.mulf %17, %18 : vector<1x64xf32>
      %c0_12 = arith.constant 0 : index
      %c0_13 = arith.constant 0 : index
      %20 = vector.load %arg11[%c0_12, %c0_13] : memref<1x64xf32, #tpu.memory_space<vmem>>, vector<1x64xf32>
      %cst_14 = arith.constant 3.906250e-03 : f32
      %21 = vector.broadcast %cst_14 : f32 to vector<1x64xf32>
      %22 = arith.mulf %20, %21 : vector<1x64xf32>
      %23 = arith.mulf %19, %19 : vector<1x64xf32>
      %24 = arith.subf %22, %23 : vector<1x64xf32>
      %cst_15 = arith.constant 9.99999974E-6 : f32
      %25 = vector.broadcast %cst_15 : f32 to vector<1x64xf32>
      %26 = arith.addf %24, %25 : vector<1x64xf32>
      %27 = math.rsqrt %26 : vector<1x64xf32>
      %c0_16 = arith.constant 0 : index
      %c0_17 = arith.constant 0 : index
      %28 = vector.load %arg5[%c0_16, %c0_17] : memref<1x64xf32, #tpu.memory_space<vmem>>, vector<1x64xf32>
      %c0_18 = arith.constant 0 : index
      %c0_19 = arith.constant 0 : index
      %29 = vector.load %arg7[%c0_18, %c0_19] : memref<1x64xf32, #tpu.memory_space<vmem>>, vector<1x64xf32>
      %30 = arith.mulf %27, %28 : vector<1x64xf32>
      %31 = arith.mulf %30, %29 : vector<1x64xf32>
      %c0_20 = arith.constant 0 : index
      %c0_21 = arith.constant 0 : index
      %32 = vector.load %arg6[%c0_20, %c0_21] : memref<1x64xf32, #tpu.memory_space<vmem>>, vector<1x64xf32>
      %33 = arith.mulf %19, %27 : vector<1x64xf32>
      %34 = arith.mulf %33, %28 : vector<1x64xf32>
      %35 = arith.subf %32, %34 : vector<1x64xf32>
      %36 = arith.mulf %35, %29 : vector<1x64xf32>
      %cst_22 = arith.constant dense<0.000000e+00> : vector<1xf32>
      %37 = vector.multi_reduction <add>, %36, %cst_22 [1] : vector<1x64xf32> to vector<1xf32>
      %38 = vector.shape_cast %37 : vector<1xf32> to vector<1x1xf32>
      %c0_23 = arith.constant 0 : index
      %c0_24 = arith.constant 0 : index
      %39 = vector.load %arg8[%c0_23, %c0_24] : memref<1x1xf32, #tpu.memory_space<vmem>>, vector<1x1xf32>
      %40 = arith.addf %38, %39 : vector<1x1xf32>
      %cst_25 = arith.constant dense<0.000000e+00> : vector<1x128xf32>
      %41 = tpu.matmul %31, %10, %cst_25 {dimension_numbers = #tpu.dot_dimension_numbers<[1], [1], [0], [0], [0, 0, 1, 0], [], []>} : vector<1x64xf32>, vector<128x64xf32>, vector<1x128xf32> -> vector<1x128xf32>
      %42 = vector.broadcast %40 : vector<1x1xf32> to vector<1x128xf32>
      %43 = arith.addf %41, %42 : vector<1x128xf32>
      %c0_26 = arith.constant 0 : index
      %c0_27 = arith.constant 0 : index
      %44 = vector.load %arg9[%c0_26, %c0_27] : memref<1x128xf32, #tpu.memory_space<vmem>>, vector<1x128xf32>
      tpu.vector_store %arg9[%c0_26, %c0_27], %43 {strides = array<i32>} : memref<1x128xf32, #tpu.memory_space<vmem>>, vector<1x128xf32>,
    } else {
    }
    return
  }
  func.func @transform_0(%arg0: i32, %arg1: i32) -> (i32, i32) {
    %c0_i32 = arith.constant 0 : i32
    %c0_i32_0 = arith.constant 0 : i32
    return %arg1, %c0_i32 : i32, i32
  }
  func.func @transform_1(%arg0: i32, %arg1: i32) -> (i32, i32) {
    %c0_i32 = arith.constant 0 : i32
    %c0_i32_0 = arith.constant 0 : i32
    %c0_i32_1 = arith.constant 0 : i32
    return %c0_i32, %c0_i32_0 : i32, i32
  }
  func.func @transform_2(%arg0: i32, %arg1: i32) -> (i32, i32) {
    %c0_i32 = arith.constant 0 : i32
    %c0_i32_0 = arith.constant 0 : i32
    %c0_i32_1 = arith.constant 0 : i32
    return %c0_i32, %c0_i32_0 : i32, i32
  }
  func.func @transform_3(%arg0: i32, %arg1: i32) -> (i32, i32) {
    %c0_i32 = arith.constant 0 : i32
    %c0_i32_0 = arith.constant 0 : i32
    %c0_i32_1 = arith.constant 0 : i32
    return %c0_i32, %c0_i32_0 : i32, i32
  }
  func.func @transform_4(%arg0: i32, %arg1: i32) -> (i32, i32) {
    %c0_i32 = arith.constant 0 : i32
    %c0_i32_0 = arith.constant 0 : i32
    %c0_i32_1 = arith.constant 0 : i32
    return %c0_i32, %c0_i32_0 : i32, i32
  }
  func.func @transform_5(%arg0: i32, %arg1: i32) -> (i32, i32) {
    %c0_i32 = arith.constant 0 : i32
    %c0_i32_0 = arith.constant 0 : i32
    %c0_i32_1 = arith.constant 0 : i32
    return %c0_i32, %c0_i32_0 : i32, i32
  }
  func.func @transform_6(%arg0: i32, %arg1: i32) -> (i32, i32) {
    %c0_i32 = arith.constant 0 : i32
    %c0_i32_0 = arith.constant 0 : i32
    %c0_i32_1 = arith.constant 0 : i32
    return %c0_i32, %c0_i32_0 : i32, i32
  }
  func.func @transform_7(%arg0: i32, %arg1: i32) -> (i32, i32) {
    %c0_i32 = arith.constant 0 : i32
    %c0_i32_0 = arith.constant 0 : i32
    return %c0_i32, %arg1 : i32, i32
  }
}

</mosaic_0001>

<llo_original>
// kernel: tpu_custom_call.1
$region0: #{tpu_custom_call.1}
  #allocation0 [shape = 'u32[]', space=smem, size = 0x4, offset = 0x4, fixed_abs, tag = 'smem constant byte address 0x4 - core index']
  #allocation1 [shape = 'u32[144,128]{1,0:T(1,128)}', space=vmem, size = 0x12000, scoped, tag = 'internal scratch']
  #allocation2 [shape = 'f32[1,64]{1,0:T(1,128)}', space=vmem, size = 0x200, scoped, tag = 'scratch operand']
  #allocation3 [shape = 'f32[1,64]{1,0:T(1,128)}', space=vmem, size = 0x200, scoped, tag = 'scratch operand']
  #allocation4 [shape = 'f32[1,1]{1,0:T(1,128)S(1)}', space=vmem, size = 0x200, scoped, tag = 'scoped memory for tpu_custom_call.1']
  %s0 = inlined_call_operand.vmem [shape: bf16[256,32], index: 0, kind: input, shape index: {}]
  %s1 = inlined_call_operand.vmem [shape: bf16[32,64], index: 1, kind: input, shape index: {}]
  %s2 = inlined_call_operand.vmem [shape: f32[1,64], index: 2, kind: input, shape index: {}]
  %s3 = inlined_call_operand.vmem [shape: f32[1,64], index: 3, kind: input, shape index: {}]
  %s4 = inlined_call_operand.vmem [shape: f32[1,64], index: 4, kind: input, shape index: {}]
  %s5 = inlined_call_operand.vmem [shape: f32[1,64], index: 5, kind: input, shape index: {}]
  %s6 = inlined_call_operand.<no memory space> [shape: f32[1,1], index: 6, kind: input, shape index: {}]
  %s7 = inlined_call_operand.hbm [shape: f32[1,256], index: 7, kind: output, shape index: {}]
  %s8 = sld [smem:[#allocation0]]
  $region73: #{tpu_custom_call.1} parent=0
    _
  %s10 = ssub.s32 1, %s8
  %s11 = scalar_select 0, %s10, %s8
  %v12 = vstv %s6
  %13 = vst [vmem:[#allocation4] sm:$0x1] %v12
  $region1: #{tpu_custom_call.1} parent=0
    #allocation5 [shape = 'u8[1024]{0}', space=vmem, size = 0x400, scoped, tag = 'output window, operand 0']
    #allocation6 [shape = 's32[2]{0}', space=sflag, size = 0x8, scoped, tag = 'scoped memory for tpu_custom_call.1']
    %14 = vsyncpa [#allocation6], 0
    %s15 = scalar_lea.sflag [#allocation6], 1
    %16 = vsyncpa %s15, 0
    loop: start=0, step=1, limit=6
    $region2: #{tpu_custom_call.1} parent=1 // loop_pre_header
      _
    $region3: #{tpu_custom_call.1} parent=1 // loop_header
      %s18 = sphi 0, %s22
      %p19 = scmp.ge.s32.totalorder %s18, 6
      %s25 = sphi 0, %s37
      %s26 = sphi 0, %s33
      %s27 = sphi 0, %s25
      %s28 = sphi 0, %s26
      %s29 = sphi 0, %s27
      %s30 = sphi 0, %s28
      %s40 = sphi 0, %s42
      %s43 = sphi 0, %s40
      %s44 = sphi 0, %s43
      %s60 = sphi 0, %s44
      %s64 = sphi 0, %s64
      %s66 = sphi 0, %s64
      %s67 = sphi 0, %s66
      %s81 = sphi 0, %s67
      %s85 = sphi 0, %s85
      %s87 = sphi 0, %s85
      %s88 = sphi 0, %s87
      %s102 = sphi 0, %s88
      %s106 = sphi 0, %s106
      %s108 = sphi 0, %s106
      %s109 = sphi 0, %s108
      %s123 = sphi 0, %s109
      %s127 = sphi 0, %s127
      %s129 = sphi 0, %s127
      %s130 = sphi 0, %s129
      %s144 = sphi 0, %s130
      %s148 = sphi 0, %s148
      %s150 = sphi 0, %s148
      %s151 = sphi 0, %s150
      %s165 = sphi 0, %s151
      %s169 = sphi 0, %s169
      %s171 = sphi 0, %s169
      %s172 = sphi 0, %s171
      %s186 = sphi 0, %s172
      %s192 = sphi 0, %s194
      %s195 = sphi 0, %s192
      %s196 = sphi 0, %s195
      %s212 = sphi 0, %s196
    $region4: #{tpu_custom_call.1} parent=1 // loop_header_branch
      %21 = sbr.rel (%p19) target = $region8
    $region5: #{tpu_custom_call.1} parent=1 // loop_body
      %s23 = ssub.s32 %s18, 1
      %s24 = ssub.s32 %s18, 2
      %s31 = sadd.s32 1, %s26
      %p32 = scmp.ge.s32.totalorder %s31, 2
      %s33 = scalar_select %p32, 0, %s31
      %s34 = sadd.s32 1, %s25
      %s35 = scalar_select %p32, %s34, %s25
      %p36 = scmp.ge.s32.totalorder %s35, 2
      %s37 = scalar_select %p36, 0, %s35
      %s38 = ssub.s32 %s26, %s33
      %p39 = scmp.eq.s32.totalorder %s38, 0
      %s41 = sadd.s32 %s40, 1
      %s42 = scalar_select %p39, %s40, %s41
      %p45 = pneg %p39
      %p46 = scmp.eq.s32.totalorder %s18, 3
      %p47 = por %p45, %p46
      %p48 = scmp.ne.s32.totalorder %s40, %s43
      %p49 = scmp.eq.s32.totalorder %s18, 0
      %p50 = por %p48, %p49
      %p51 = scmp.ne.s32.totalorder %s40, %s43
      %p52 = scmp.eq.s32.totalorder %s23, 3
      %p53 = por %p51, %p52
      %p54 = scmp.ne.s32.totalorder %s43, %s44
      %p55 = scmp.eq.s32.totalorder %s23, 0
      %p56 = por %p54, %p55
      %p57 = scmp.ne.s32.totalorder %s43, %s44
      %p58 = scmp.eq.s32.totalorder %s24, 3
      %p59 = por %p57, %p58
      %p61 = scmp.ne.s32.totalorder %s44, %s60
      %p62 = scmp.eq.s32.totalorder %s24, 0
      %p63 = por %p61, %p62
      %s65 = sadd.s32 %s64, 1
      %p68 = scmp.eq.s32.totalorder %s18, 3
      %p69 = scmp.ne.s32.totalorder %s64, %s66
      %p70 = scmp.eq.s32.totalorder %s18, 0
      %p71 = por %p69, %p70
      %p72 = scmp.ne.s32.totalorder %s64, %s66
      %p73 = scmp.eq.s32.totalorder %s23, 3
      %p74 = por %p72, %p73
      %p75 = scmp.ne.s32.totalorder %s66, %s67
      %p76 = scmp.eq.s32.totalorder %s23, 0
      %p77 = por %p75, %p76
      %p78 = scmp.ne.s32.totalorder %s66, %s67
      %p79 = scmp.eq.s32.totalorder %s24, 3
      %p80 = por %p78, %p79
      %p82 = scmp.ne.s32.totalorder %s67, %s81
      %p83 = scmp.eq.s32.totalorder %s24, 0
      %p84 = por %p82, %p83
      %s86 = sadd.s32 %s85, 1
      %p89 = scmp.eq.s32.totalorder %s18, 3
      %p90 = scmp.ne.s32.totalorder %s85, %s87
      %p91 = scmp.eq.s32.totalorder %s18, 0
      %p92 = por %p90, %p91
      %p93 = scmp.ne.s32.totalorder %s85, %s87
      %p94 = scmp.eq.s32.totalorder %s23, 3
      %p95 = por %p93, %p94
      %p96 = scmp.ne.s32.totalorder %s87, %s88
      %p97 = scmp.eq.s32.totalorder %s23, 0
      %p98 = por %p96, %p97
      %p99 = scmp.ne.s32.totalorder %s87, %s88
      %p100 = scmp.eq.s32.totalorder %s24, 3
      %p101 = por %p99, %p100
      %p103 = scmp.ne.s32.totalorder %s88, %s102
      %p104 = scmp.eq.s32.totalorder %s24, 0
      %p105 = por %p103, %p104
      %s107 = sadd.s32 %s106, 1
      %p110 = scmp.eq.s32.totalorder %s18, 3
      %p111 = scmp.ne.s32.totalorder %s106, %s108
      %p112 = scmp.eq.s32.totalorder %s18, 0
      %p113 = por %p111, %p112
      %p114 = scmp.ne.s32.totalorder %s106, %s108
      %p115 = scmp.eq.s32.totalorder %s23, 3
      %p116 = por %p114, %p115
      %p117 = scmp.ne.s32.totalorder %s108, %s109
      %p118 = scmp.eq.s32.totalorder %s23, 0
      %p119 = por %p117, %p118
      %p120 = scmp.ne.s32.totalorder %s108, %s109
      %p121 = scmp.eq.s32.totalorder %s24, 3
      %p122 = por %p120, %p121
      %p124 = scmp.ne.s32.totalorder %s109, %s123
      %p125 = scmp.eq.s32.totalorder %s24, 0
      %p126 = por %p124, %p125
      %s128 = sadd.s32 %s127, 1
      %p131 = scmp.eq.s32.totalorder %s18, 3
      %p132 = scmp.ne.s32.totalorder %s127, %s129
      %p133 = scmp.eq.s32.totalorder %s18, 0
      %p134 = por %p132, %p133
      %p135 = scmp.ne.s32.totalorder %s127, %s129
      %p136 = scmp.eq.s32.totalorder %s23, 3
      %p137 = por %p135, %p136
      %p138 = scmp.ne.s32.totalorder %s129, %s130
      %p139 = scmp.eq.s32.totalorder %s23, 0
      %p140 = por %p138, %p139
      %p141 = scmp.ne.s32.totalorder %s129, %s130
      %p142 = scmp.eq.s32.totalorder %s24, 3
      %p143 = por %p141, %p142
      %p145 = scmp.ne.s32.totalorder %s130, %s144
      %p146 = scmp.eq.s32.totalorder %s24, 0
      %p147 = por %p145, %p146
      %s149 = sadd.s32 %s148, 1
      %p152 = scmp.eq.s32.totalorder %s18, 3
      %p153 = scmp.ne.s32.totalorder %s148, %s150
      %p154 = scmp.eq.s32.totalorder %s18, 0
      %p155 = por %p153, %p154
      %p156 = scmp.ne.s32.totalorder %s148, %s150
      %p157 = scmp.eq.s32.totalorder %s23, 3
      %p158 = por %p156, %p157
      %p159 = scmp.ne.s32.totalorder %s150, %s151
      %p160 = scmp.eq.s32.totalorder %s23, 0
      %p161 = por %p159, %p160
      %p162 = scmp.ne.s32.totalorder %s150, %s151
      %p163 = scmp.eq.s32.totalorder %s24, 3
      %p164 = por %p162, %p163
      %p166 = scmp.ne.s32.totalorder %s151, %s165
      %p167 = scmp.eq.s32.totalorder %s24, 0
      %p168 = por %p166, %p167
      %s170 = sadd.s32 %s169, 1
      %p173 = scmp.eq.s32.totalorder %s18, 3
      %p174 = scmp.ne.s32.totalorder %s169, %s171
      %p175 = scmp.eq.s32.totalorder %s18, 0
      %p176 = por %p174, %p175
      %p177 = scmp.ne.s32.totalorder %s169, %s171
      %p178 = scmp.eq.s32.totalorder %s23, 3
      %p179 = por %p177, %p178
      %p180 = scmp.ne.s32.totalorder %s171, %s172
      %p181 = scmp.eq.s32.totalorder %s23, 0
      %p182 = por %p180, %p181
      %p183 = scmp.ne.s32.totalorder %s171, %s172
      %p184 = scmp.eq.s32.totalorder %s24, 3
      %p185 = por %p183, %p184
      %p187 = scmp.ne.s32.totalorder %s172, %s186
      %p188 = scmp.eq.s32.totalorder %s24, 0
      %p189 = por %p187, %p188
      %s190 = ssub.s32 %s26, %s33
      %p191 = scmp.eq.s32.totalorder %s190, 0
      %s193 = sadd.s32 %s192, 1
      %s194 = scalar_select %p191, %s192, %s193
      %p197 = pneg %p191
      %p198 = scmp.eq.s32.totalorder %s18, 3
      %p199 = por %p197, %p198
      %p200 = scmp.ne.s32.totalorder %s192, %s195
      %p201 = scmp.eq.s32.totalorder %s18, 0
      %p202 = por %p200, %p201
      %p203 = scmp.ne.s32.totalorder %s192, %s195
      %p204 = scmp.eq.s32.totalorder %s23, 3
      %p205 = por %p203, %p204
      %p206 = scmp.ne.s32.totalorder %s195, %s196
      %p207 = scmp.eq.s32.totalorder %s23, 0
      %p208 = por %p206, %p207
      %p209 = scmp.ne.s32.totalorder %s195, %s196
      %p210 = scmp.eq.s32.totalorder %s24, 3
      %p211 = por %p209, %p210
      %p213 = scmp.ne.s32.totalorder %s196, %s212
      %p214 = scmp.eq.s32.totalorder %s24, 0
      %p215 = por %p213, %p214
      %p216 = scmp.le.s32.totalorder 1, %s18
      %p217 = scmp.lt.s32.totalorder %s18, 5
      %p218 = pnand %p216, %p217
      %p219 = pneg %p218
      // Predicated region
      $region9: #{tpu_custom_call.1} parent=5 // pred_check
        _
      $region10: #{tpu_custom_call.1} parent=5 // pred_check_branch
        %221 = sbr.rel (%p218) target = $region12
      $region11: #{tpu_custom_call.1} parent=5 // pred_region
        %s222 = ssub.s32 %s18, 1
        // Predicated region
        $region13: #{tpu_custom_call.1} parent=11 // pred_check
          %p223 = pneg %p77
        $region14: #{tpu_custom_call.1} parent=11 // pred_check_branch
          %225 = sbr.rel (%p223) target = $region16
        $region15: #{tpu_custom_call.1} parent=11 // pred_region
          _
        $region16: #{tpu_custom_call.1} parent=11 // pred_fallthru
          _
        // Predicated region
        $region17: #{tpu_custom_call.1} parent=11 // pred_check
          %p226 = pneg %p98
        $region18: #{tpu_custom_call.1} parent=11 // pred_check_branch
          %228 = sbr.rel (%p226) target = $region20
        $region19: #{tpu_custom_call.1} parent=11 // pred_region
          _
        $region20: #{tpu_custom_call.1} parent=11 // pred_fallthru
          _
        // Predicated region
        $region21: #{tpu_custom_call.1} parent=11 // pred_check
          %p229 = pneg %p119
        $region22: #{tpu_custom_call.1} parent=11 // pred_check_branch
          %231 = sbr.rel (%p229) target = $region24
        $region23: #{tpu_custom_call.1} parent=11 // pred_region
          _
        $region24: #{tpu_custom_call.1} parent=11 // pred_fallthru
          _
        // Predicated region
        $region25: #{tpu_custom_call.1} parent=11 // pred_check
          %p232 = pneg %p140
        $region26: #{tpu_custom_call.1} parent=11 // pred_check_branch
          %234 = sbr.rel (%p232) target = $region28
        $region27: #{tpu_custom_call.1} parent=11 // pred_region
          _
        $region28: #{tpu_custom_call.1} parent=11 // pred_fallthru
          _
        // Predicated region
        $region29: #{tpu_custom_call.1} parent=11 // pred_check
          %p235 = pneg %p161
        $region30: #{tpu_custom_call.1} parent=11 // pred_check_branch
          %237 = sbr.rel (%p235) target = $region32
        $region31: #{tpu_custom_call.1} parent=11 // pred_region
          _
        $region32: #{tpu_custom_call.1} parent=11 // pred_fallthru
          _
        // Predicated region
        $region33: #{tpu_custom_call.1} parent=11 // pred_check
          %p238 = pneg %p182
        $region34: #{tpu_custom_call.1} parent=11 // pred_check_branch
          %240 = sbr.rel (%p238) target = $region36
        $region35: #{tpu_custom_call.1} parent=11 // pred_region
          _
        $region36: #{tpu_custom_call.1} parent=11 // pred_fallthru
          _
      $region12: #{tpu_custom_call.1} parent=5 // pred_fallthru
        _
      %p241 = scmp.lt.s32.totalorder %s18, 4
      // Predicated region
      $region37: #{tpu_custom_call.1} parent=5 // pred_check
        %p242 = pneg %p241
      $region38: #{tpu_custom_call.1} parent=5 // pred_check_branch
        %244 = sbr.rel (%p242) target = $region40
      $region39: #{tpu_custom_call.1} parent=5 // pred_region
        // Predicated region
        $region41: #{tpu_custom_call.1} parent=39 // pred_check
          %p245 = pneg %p50
        $region42: #{tpu_custom_call.1} parent=39 // pred_check_branch
          %247 = sbr.rel (%p245) target = $region44
        $region43: #{tpu_custom_call.1} parent=39 // pred_region
          %s248 = smul.u32 16, %s26
          %p249 = scmp.lt.s32.totalorder %s248, 31
          %s250 = scalar_select %p249, %s248, 31
          %s251 = smul.addr %s250, 4
          %s252 = scalar_lea.vmem %s0, %s251
          %s253 = smul.u32 16, %s26
        $region44: #{tpu_custom_call.1} parent=39 // pred_fallthru
          _
      $region40: #{tpu_custom_call.1} parent=5 // pred_fallthru
        _
      %p254 = scmp.le.s32.totalorder 1, %s18
      %p255 = scmp.lt.s32.totalorder %s18, 5
      %p256 = pnand %p254, %p255
      %p257 = pneg %p256
      // Predicated region
      $region45: #{tpu_custom_call.1} parent=5 // pred_check
        _
      $region46: #{tpu_custom_call.1} parent=5 // pred_check_branch
        %259 = sbr.rel (%p256) target = $region48
      $region47: #{tpu_custom_call.1} parent=5 // pred_region
        %s260 = ssub.s32 %s18, 1
        %s261 = smul.u32 16, %s28
        %p262 = scmp.lt.s32.totalorder %s261, 31
        %s263 = scalar_select %p262, %s261, 31
        %s264 = smul.addr %s263, 4
        %s265 = scalar_lea.vmem %s0, %s264
        %p266 = pneg %p56
        %p267 = pneg %p53
        %p268 = pneg %p77
        %p269 = pneg %p74
        %p270 = pneg %p98
        %p271 = pneg %p95
        %p272 = pneg %p119
        %p273 = pneg %p116
        %p274 = pneg %p140
        %p275 = pneg %p137
        %p276 = pneg %p161
        %p277 = pneg %p158
        %p278 = pneg %p182
        %p279 = pneg %p179
        %p280 = pneg %p208
        %p281 = pneg %p205
        %s282 = sand.u32 %s195, 1
        %s283 = scalar_lea.sflag [#allocation6], %s282
        %s284 = sand.u32 %s195, 1
        %s285 = scalar_lea.vmem [#allocation5], %s284
        %s286 = smul.u32 16, %s28
        %p287 = scmp.lt.s32.totalorder %s286, 31
        %s288 = scalar_select %p287, %s286, 31
        %s289 = smul.addr %s288, 4
        %s290 = scalar_lea.vmem %s0, %s289
        %s291 = smul.u32 16, %s28
        %v293 = vld [vmem:[%s290] sm:$0xf]
        %v294 = vld [vmem:[%s290 + $0x4] sm:$0xf]
        %v295 = vld [vmem:[%s290 + $0x8] sm:$0xf]
        %v296 = vld [vmem:[%s290 + $0xc] sm:$0xf]
        %v297 = vld [vmem:[%s290 + $0x10] sm:$0xf]
        %v298 = vld [vmem:[%s290 + $0x14] sm:$0xf]
        %v299 = vld [vmem:[%s290 + $0x18] sm:$0xf]
        %v300 = vld [vmem:[%s290 + $0x1c] sm:$0xf]
        %v301 = vld [vmem:[%s290 + $0x20] sm:$0xf]
        %v302 = vld [vmem:[%s290 + $0x24] sm:$0xf]
        %v303 = vld [vmem:[%s290 + $0x28] sm:$0xf]
        %v304 = vld [vmem:[%s290 + $0x2c] sm:$0xf]
        %v305 = vld [vmem:[%s290 + $0x30] sm:$0xf]
        %v306 = vld [vmem:[%s290 + $0x34] sm:$0xf]
        %v307 = vld [vmem:[%s290 + $0x38] sm:$0xf]
        %v308 = vld [vmem:[%s290 + $0x3c] sm:$0xf]
        %v309 = vld [vmem:[%s1] sm:$0xf]
        %v310 = vld [vmem:[%s1 + $0x4] sm:$0xf]
        %v311 = vld [vmem:[%s1 + $0x8] sm:$0xf]
        %v312 = vld [vmem:[%s1 + $0xc] sm:$0xf]
        %v313 = vld [vmem:[%s2] sm:$0x1]
        %v315 = vlaneseq
        %v316 = vshrl.u32 %v315, 7
        %v317 = vsub.s32 0, %v316
        %v318 = vrot.slane %v313, %v317
        %v336 = vunpack.c.l.b16 %v293
        %v337 = vunpack.c.l.b16 %v294
        %v338 = vunpack.c.l.b16 %v295
        %v339 = vunpack.c.l.b16 %v296
        %v340 = vunpack.c.l.b16 %v297
        %v341 = vunpack.c.l.b16 %v298
        %v342 = vunpack.c.l.b16 %v299
        %v343 = vunpack.c.l.b16 %v300
        %v344 = vunpack.c.l.b16 %v301
        %v345 = vunpack.c.l.b16 %v302
        %v346 = vunpack.c.l.b16 %v303
        %v347 = vunpack.c.l.b16 %v304
        %v348 = vunpack.c.l.b16 %v305
        %v349 = vunpack.c.l.b16 %v306
        %v350 = vunpack.c.l.b16 %v307
        %v351 = vunpack.c.l.b16 %v308
        %v352 = vpack.c.b16 %v337, %v336
        %v353 = vpack.c.b16 %v339, %v338
        %v354 = vpack.c.b16 %v341, %v340
        %v355 = vpack.c.b16 %v343, %v342
        %v356 = vpack.c.b16 %v345, %v344
        %v357 = vpack.c.b16 %v347, %v346
        %v358 = vpack.c.b16 %v349, %v348
        %v359 = vpack.c.b16 %v351, %v350
        %v364 = vunpack.c.l.b16 %v309
        %v365 = vunpack.c.l.b16 %v310
        %v366 = vunpack.c.l.b16 %v311
        %v367 = vunpack.c.l.b16 %v312
        %v368 = vpack.c.b16 %v365, %v364
        %v369 = vpack.c.b16 %v367, %v366
        %vm372 = vcmask 261120
        %v374 = vsel %vm372, %v352, 0
        %v377 = vsel %vm372, %v353, 0
        %v380 = vsel %vm372, %v354, 0
        %v383 = vsel %vm372, %v355, 0
        %v386 = vsel %vm372, %v356, 0
        %v389 = vsel %vm372, %v357, 0
        %v392 = vsel %vm372, %v358, 0
        %v395 = vsel %vm372, %v359, 0
        %397 = vmatprep.subr.bf16.mxu0 0
        %398 = vmatpush1.bf16.msra.mxu0 %v368
        %399 = vmatprep.subr.bf16.mxu0 0
        %400 = vmatpush1.bf16.msra.mxu0 %v369
        %401 = vmatprep.subr.bf16.mxu0 0
        %402 = vmatpush1.bf16.msra.mxu0 0
        %403 = vmatprep.subr.bf16.mxu0 0
        %404 = vmatpush1.bf16.msra.mxu0 0
        %405 = vmatprep.subr.bf16.mxu0 0
        %406 = vmatpush1.bf16.msra.mxu0 0
        %407 = vmatprep.subr.bf16.mxu0 0
        %408 = vmatpush1.bf16.msra.mxu0 0
        %409 = vmatprep.subr.bf16.mxu0 0
        %410 = vmatpush1.bf16.msra.mxu0 0
        %411 = vmatprep.subr.bf16.mxu0 0
        %412 = vmatpush1.bf16.msra.mxu0 0
        %413 = vmatprep.subr.bf16.mxu0 0
        %414 = vmatpush1.bf16.msra.mxu0 0
        %415 = vmatprep.subr.bf16.mxu0 0
        %416 = vmatpush1.bf16.msra.mxu0 0
        %417 = vmatprep.subr.bf16.mxu0 0
        %418 = vmatpush1.bf16.msra.mxu0 0
        %419 = vmatprep.subr.bf16.mxu0 0
        %420 = vmatpush1.bf16.msra.mxu0 0
        %421 = vmatprep.subr.bf16.mxu0 0
        %422 = vmatpush1.bf16.msra.mxu0 0
        %423 = vmatprep.subr.bf16.mxu0 0
        %424 = vmatpush1.bf16.msra.mxu0 0
        %425 = vmatprep.subr.bf16.mxu0 0
        %426 = vmatpush1.bf16.msra.mxu0 0
        %427 = vmatprep.subr.bf16.mxu0 0
        %428 = vmatpush1.bf16.msra.mxu0 0
        %429 = vmatprep.mubr.bf16.mxu0 0
        %430 = vmatmul.mubr.bf16.gmra.mrb[0].mxu0 %v374
        %v431 = vpop.f32.mrb[0].mxu0
        %v432 = vadd.f32 %v318, %v431
        %v433 = vpop.f32.mrb[0].mxu0
        %v434 = vpop.f32.mrb[0].mxu0
        %v435 = vadd.f32 %v318, %v434
        %v436 = vpop.f32.mrb[0].mxu0
        %437 = vmatprep.mubr.bf16.mxu0 0
        %438 = vmatmul.mubr.bf16.gmra.mrb[0].mxu0 %v377
        %v439 = vpop.f32.mrb[0].mxu0
        %v440 = vadd.f32 %v318, %v439
        %v441 = vpop.f32.mrb[0].mxu0
        %v442 = vpop.f32.mrb[0].mxu0
        %v443 = vadd.f32 %v318, %v442
        %v444 = vpop.f32.mrb[0].mxu0
        %445 = vmatprep.mubr.bf16.mxu0 0
        %446 = vmatmul.mubr.bf16.gmra.mrb[0].mxu0 %v380
        %v447 = vpop.f32.mrb[0].mxu0
        %v448 = vadd.f32 %v318, %v447
        %v449 = vpop.f32.mrb[0].mxu0
        %v450 = vpop.f32.mrb[0].mxu0
        %v451 = vadd.f32 %v318, %v450
        %v452 = vpop.f32.mrb[0].mxu0
        %453 = vmatprep.mubr.bf16.mxu0 0
        %454 = vmatmul.mubr.bf16.gmra.mrb[0].mxu0 %v383
        %v455 = vpop.f32.mrb[0].mxu0
        %v456 = vadd.f32 %v318, %v455
        %v457 = vpop.f32.mrb[0].mxu0
        %v458 = vpop.f32.mrb[0].mxu0
        %v459 = vadd.f32 %v318, %v458
        %v460 = vpop.f32.mrb[0].mxu0
        %461 = vmatprep.mubr.bf16.mxu0 0
        %462 = vmatmul.mubr.bf16.gmra.mrb[0].mxu0 %v386
        %v463 = vpop.f32.mrb[0].mxu0
        %v464 = vadd.f32 %v318, %v463
        %v465 = vpop.f32.mrb[0].mxu0
        %v466 = vpop.f32.mrb[0].mxu0
        %v467 = vadd.f32 %v318, %v466
        %v468 = vpop.f32.mrb[0].mxu0
        %469 = vmatprep.mubr.bf16.mxu0 0
        %470 = vmatmul.mubr.bf16.gmra.mrb[0].mxu0 %v389
        %v471 = vpop.f32.mrb[0].mxu0
        %v472 = vadd.f32 %v318, %v471
        %v473 = vpop.f32.mrb[0].mxu0
        %v474 = vpop.f32.mrb[0].mxu0
        %v475 = vadd.f32 %v318, %v474
        %v476 = vpop.f32.mrb[0].mxu0
        %477 = vmatprep.mubr.bf16.mxu0 0
        %478 = vmatmul.mubr.bf16.gmra.mrb[0].mxu0 %v392
        %v479 = vpop.f32.mrb[0].mxu0
        %v480 = vadd.f32 %v318, %v479
        %v481 = vpop.f32.mrb[0].mxu0
        %v482 = vpop.f32.mrb[0].mxu0
        %v483 = vadd.f32 %v318, %v482
        %v484 = vpop.f32.mrb[0].mxu0
        %485 = vmatprep.mubr.bf16.mxu0 0
        %486 = vmatmul.mubr.bf16.gmra.mrb[0].mxu0 %v395
        %v487 = vpop.f32.mrb[0].mxu0
        %v488 = vadd.f32 %v318, %v487
        %v489 = vpop.f32.mrb[0].mxu0
        %v490 = vpop.f32.mrb[0].mxu0
        %v491 = vadd.f32 %v318, %v490
        %v492 = vpop.f32.mrb[0].mxu0
        %493 = vdwg.mxu0
        %vm494 = vcmp.ge.f32.partialorder %v432, 0.0
        %vm495 = vcmp.ge.f32.partialorder %v435, 0.0
        %vm496 = vcmp.ge.f32.partialorder %v440, 0.0
        %vm497 = vcmp.ge.f32.partialorder %v443, 0.0
        %vm498 = vcmp.ge.f32.partialorder %v448, 0.0
        %vm499 = vcmp.ge.f32.partialorder %v451, 0.0
        %vm500 = vcmp.ge.f32.partialorder %v456, 0.0
        %vm501 = vcmp.ge.f32.partialorder %v459, 0.0
        %vm502 = vcmp.ge.f32.partialorder %v464, 0.0
        %vm503 = vcmp.ge.f32.partialorder %v467, 0.0
        %vm504 = vcmp.ge.f32.partialorder %v472, 0.0
        %vm505 = vcmp.ge.f32.partialorder %v475, 0.0
        %vm506 = vcmp.ge.f32.partialorder %v480, 0.0
        %vm507 = vcmp.ge.f32.partialorder %v483, 0.0
        %vm508 = vcmp.ge.f32.partialorder %v488, 0.0
        %vm509 = vcmp.ge.f32.partialorder %v491, 0.0
        %v510 = vmul.f32 %v432, 0.01
        %v511 = vmul.f32 %v435, 0.01
        %v512 = vmul.f32 %v440, 0.01
        %v513 = vmul.f32 %v443, 0.01
        %v514 = vmul.f32 %v448, 0.01
        %v515 = vmul.f32 %v451, 0.01
        %v516 = vmul.f32 %v456, 0.01
        %v517 = vmul.f32 %v459, 0.01
        %v518 = vmul.f32 %v464, 0.01
        %v519 = vmul.f32 %v467, 0.01
        %v520 = vmul.f32 %v472, 0.01
        %v521 = vmul.f32 %v475, 0.01
        %v522 = vmul.f32 %v480, 0.01
        %v523 = vmul.f32 %v483, 0.01
        %v524 = vmul.f32 %v488, 0.01
        %v525 = vmul.f32 %v491, 0.01
        %v526 = vsel %vm494, %v432, %v510
        %v527 = vsel %vm495, %v435, %v511
        %v528 = vsel %vm496, %v440, %v512
        %v529 = vsel %vm497, %v443, %v513
        %v530 = vsel %vm498, %v448, %v514
        %v531 = vsel %vm499, %v451, %v515
        %v532 = vsel %vm500, %v456, %v516
        %v533 = vsel %vm501, %v459, %v517
        %v534 = vsel %vm502, %v464, %v518
        %v535 = vsel %vm503, %v467, %v519
        %v536 = vsel %vm504, %v472, %v520
        %v537 = vsel %vm505, %v475, %v521
        %v538 = vsel %vm506, %v480, %v522
        %v539 = vsel %vm507, %v483, %v523
        %v540 = vsel %vm508, %v488, %v524
        %v541 = vsel %vm509, %v491, %v525
        %p542 = scmp.eq.s32.totalorder %s27, 0
        // Predicated region
        $region49: #{tpu_custom_call.1} parent=47 // pred_check
          %p543 = pneg %p542
        $region50: #{tpu_custom_call.1} parent=47 // pred_check_branch
          %545 = sbr.rel (%p543) target = $region52
        $region51: #{tpu_custom_call.1} parent=47 // pred_region
          %p546 = scmp.eq.s32.totalorder %s28, 0
          // Predicated region
          $region53: #{tpu_custom_call.1} parent=51 // pred_check
            %p547 = pneg %p546
          $region54: #{tpu_custom_call.1} parent=51 // pred_check_branch
            %549 = sbr.rel (%p547) target = $region56
          $region55: #{tpu_custom_call.1} parent=51 // pred_region
            %vm550 = vcmask 516096
            %551 = vst.msk [vmem:[#allocation2] sm:$0x1] %vm550, 0.0
            %552 = vst.msk [vmem:[#allocation3] sm:$0x1] %vm550, 0.0
          $region56: #{tpu_custom_call.1} parent=51 // pred_fallthru
            _
          %s553 = smul.u32 %s28, 128
          %v554 = vlaneseq
          %v555 = vshrl.u32 %v554, 7
          %v556 = vadd.s32 %v555, 8
          %v557 = vadd.s32 %v555, 16
          %v558 = vadd.s32 %v555, 24
          %v559 = vadd.s32 %v555, 32
          %v560 = vadd.s32 %v555, 40
          %v561 = vadd.s32 %v555, 48
          %v562 = vadd.s32 %v555, 56
          %v563 = vadd.s32 %v555, 64
          %v564 = vadd.s32 %v555, 72
          %v565 = vadd.s32 %v555, 80
          %v566 = vadd.s32 %v555, 88
          %v567 = vadd.s32 %v555, 96
          %v568 = vadd.s32 %v555, 104
          %v569 = vadd.s32 %v555, 112
          %v570 = vadd.s32 %v555, 120
          %v571 = vstv %s553
          %v572 = vadd.s32 %v571, %v555
          %v573 = vadd.s32 %v571, %v556
          %v574 = vadd.s32 %v571, %v557
          %v575 = vadd.s32 %v571, %v558
          %v576 = vadd.s32 %v571, %v559
          %v577 = vadd.s32 %v571, %v560
          %v578 = vadd.s32 %v571, %v561
          %v579 = vadd.s32 %v571, %v562
          %v580 = vadd.s32 %v571, %v563
          %v581 = vadd.s32 %v571, %v564
          %v582 = vadd.s32 %v571, %v565
          %v583 = vadd.s32 %v571, %v566
          %v584 = vadd.s32 %v571, %v567
          %v585 = vadd.s32 %v571, %v568
          %v586 = vadd.s32 %v571, %v569
          %v587 = vadd.s32 %v571, %v570
          %vm588 = vcmp.lt.s32.totalorder %v572, 256
          %vm589 = vcmp.lt.s32.totalorder %v573, 256
          %vm590 = vcmp.lt.s32.totalorder %v574, 256
          %vm591 = vcmp.lt.s32.totalorder %v575, 256
          %vm592 = vcmp.lt.s32.totalorder %v576, 256
          %vm593 = vcmp.lt.s32.totalorder %v577, 256
          %vm594 = vcmp.lt.s32.totalorder %v578, 256
          %vm595 = vcmp.lt.s32.totalorder %v579, 256
          %vm596 = vcmp.lt.s32.totalorder %v580, 256
          %vm597 = vcmp.lt.s32.totalorder %v581, 256
          %vm598 = vcmp.lt.s32.totalorder %v582, 256
          %vm599 = vcmp.lt.s32.totalorder %v583, 256
          %vm600 = vcmp.lt.s32.totalorder %v584, 256
          %vm601 = vcmp.lt.s32.totalorder %v585, 256
          %vm602 = vcmp.lt.s32.totalorder %v586, 256
          %vm603 = vcmp.lt.s32.totalorder %v587, 256
          %v604 = vsel %vm588, 1, 0
          %v605 = vsel %vm589, 1, 0
          %v606 = vsel %vm590, 1, 0
          %v607 = vsel %vm591, 1, 0
          %v608 = vsel %vm592, 1, 0
          %v609 = vsel %vm593, 1, 0
          %v610 = vsel %vm594, 1, 0
          %v611 = vsel %vm595, 1, 0
          %v612 = vsel %vm596, 1, 0
          %v613 = vsel %vm597, 1, 0
          %v614 = vsel %vm598, 1, 0
          %v615 = vsel %vm599, 1, 0
          %v616 = vsel %vm600, 1, 0
          %v617 = vsel %vm601, 1, 0
          %v618 = vsel %vm602, 1, 0
          %v619 = vsel %vm603, 1, 0
          %vm620 = vcmp.eq.s32.totalorder %v604, 1
          %vm621 = vcmp.eq.s32.totalorder %v605, 1
          %vm622 = vcmp.eq.s32.totalorder %v606, 1
          %vm623 = vcmp.eq.s32.totalorder %v607, 1
          %vm624 = vcmp.eq.s32.totalorder %v608, 1
          %vm625 = vcmp.eq.s32.totalorder %v609, 1
          %vm626 = vcmp.eq.s32.totalorder %v610, 1
          %vm627 = vcmp.eq.s32.totalorder %v611, 1
          %vm628 = vcmp.eq.s32.totalorder %v612, 1
          %vm629 = vcmp.eq.s32.totalorder %v613, 1
          %vm630 = vcmp.eq.s32.totalorder %v614, 1
          %vm631 = vcmp.eq.s32.totalorder %v615, 1
          %vm632 = vcmp.eq.s32.totalorder %v616, 1
          %vm633 = vcmp.eq.s32.totalorder %v617, 1
          %vm634 = vcmp.eq.s32.totalorder %v618, 1
          %vm635 = vcmp.eq.s32.totalorder %v619, 1
          %v636 = vsel %vm620, %v526, 0.0
          %v637 = vsel %vm621, %v527, 0.0
          %v638 = vsel %vm622, %v528, 0.0
          %v639 = vsel %vm623, %v529, 0.0
          %v640 = vsel %vm624, %v530, 0.0
          %v641 = vsel %vm625, %v531, 0.0
          %v642 = vsel %vm626, %v532, 0.0
          %v643 = vsel %vm627, %v533, 0.0
          %v644 = vsel %vm628, %v534, 0.0
          %v645 = vsel %vm629, %v535, 0.0
          %v646 = vsel %vm630, %v536, 0.0
          %v647 = vsel %vm631, %v537, 0.0
          %v648 = vsel %vm632, %v538, 0.0
          %v649 = vsel %vm633, %v539, 0.0
          %v650 = vsel %vm634, %v540, 0.0
          %v651 = vsel %vm635, %v541, 0.0
          %v652 = vld [vmem:[#allocation2] sm:$0x1]
          %vm653 = vcmask 523264
          %v654 = vsel %vm653, %v636, 0.0
          %v655 = vsel %vm653, %v637, 0.0
          %v656 = vadd.f32 %v654, %v655
          %v657 = vsel %vm653, %v638, 0.0
          %v658 = vadd.f32 %v656, %v657
          %v659 = vsel %vm653, %v639, 0.0
          %v660 = vadd.f32 %v658, %v659
          %v661 = vsel %vm653, %v640, 0.0
          %v662 = vadd.f32 %v660, %v661
          %v663 = vsel %vm653, %v641, 0.0
          %v664 = vadd.f32 %v662, %v663
          %v665 = vsel %vm653, %v642, 0.0
          %v666 = vadd.f32 %v664, %v665
          %v667 = vsel %vm653, %v643, 0.0
          %v668 = vadd.f32 %v666, %v667
          %v669 = vsel %vm653, %v644, 0.0
          %v670 = vadd.f32 %v668, %v669
          %v671 = vsel %vm653, %v645, 0.0
          %v672 = vadd.f32 %v670, %v671
          %v673 = vsel %vm653, %v646, 0.0
          %v674 = vadd.f32 %v672, %v673
          %v675 = vsel %vm653, %v647, 0.0
          %v676 = vadd.f32 %v674, %v675
          %v677 = vsel %vm653, %v648, 0.0
          %v678 = vadd.f32 %v676, %v677
          %v679 = vsel %vm653, %v649, 0.0
          %v680 = vadd.f32 %v678, %v679
          %v681 = vsel %vm653, %v650, 0.0
          %v682 = vadd.f32 %v680, %v681
          %v683 = vsel %vm653, %v651, 0.0
          %v684 = vadd.f32 %v682, %v683
          %v685 = vrot.slane %v684, 4
          %v686 = vadd.f32 %v684, %v685
          %v687 = vrot.slane %v686, 2
          %v688 = vadd.f32 %v686, %v687
          %v689 = vrot.slane %v688, 1
          %v690 = vadd.f32 %v688, %v689
          %v691 = vadd.f32 %v652, %v690
          %vm692 = vcmask 516096
          %693 = vst.msk [vmem:[#allocation2] sm:$0x1] %vm692, %v691
          %v694 = vld [vmem:[#allocation3] sm:$0x1]
          %v695 = vmul.f32 %v636, %v636
          %v696 = vmul.f32 %v637, %v637
          %v697 = vmul.f32 %v638, %v638
          %v698 = vmul.f32 %v639, %v639
          %v699 = vmul.f32 %v640, %v640
          %v700 = vmul.f32 %v641, %v641
          %v701 = vmul.f32 %v642, %v642
          %v702 = vmul.f32 %v643, %v643
          %v703 = vmul.f32 %v644, %v644
          %v704 = vmul.f32 %v645, %v645
          %v705 = vmul.f32 %v646, %v646
          %v706 = vmul.f32 %v647, %v647
          %v707 = vmul.f32 %v648, %v648
          %v708 = vmul.f32 %v649, %v649
          %v709 = vmul.f32 %v650, %v650
          %v710 = vmul.f32 %v651, %v651
          %v711 = vsel %vm653, %v695, 0.0
          %v712 = vsel %vm653, %v696, 0.0
          %v713 = vadd.f32 %v711, %v712
          %v714 = vsel %vm653, %v697, 0.0
          %v715 = vadd.f32 %v713, %v714
          %v716 = vsel %vm653, %v698, 0.0
          %v717 = vadd.f32 %v715, %v716
          %v718 = vsel %vm653, %v699, 0.0
          %v719 = vadd.f32 %v717, %v718
          %v720 = vsel %vm653, %v700, 0.0
          %v721 = vadd.f32 %v719, %v720
          %v722 = vsel %vm653, %v701, 0.0
          %v723 = vadd.f32 %v721, %v722
          %v724 = vsel %vm653, %v702, 0.0
          %v725 = vadd.f32 %v723, %v724
          %v726 = vsel %vm653, %v703, 0.0
          %v727 = vadd.f32 %v725, %v726
          %v728 = vsel %vm653, %v704, 0.0
          %v729 = vadd.f32 %v727, %v728
          %v730 = vsel %vm653, %v705, 0.0
          %v731 = vadd.f32 %v729, %v730
          %v732 = vsel %vm653, %v706, 0.0
          %v733 = vadd.f32 %v731, %v732
          %v734 = vsel %vm653, %v707, 0.0
          %v735 = vadd.f32 %v733, %v734
          %v736 = vsel %vm653, %v708, 0.0
          %v737 = vadd.f32 %v735, %v736
          %v738 = vsel %vm653, %v709, 0.0
          %v739 = vadd.f32 %v737, %v738
          %v740 = vsel %vm653, %v710, 0.0
          %v741 = vadd.f32 %v739, %v740
          %v742 = vrot.slane %v741, 4
          %v743 = vadd.f32 %v741, %v742
          %v744 = vrot.slane %v743, 2
          %v745 = vadd.f32 %v743, %v744
          %v746 = vrot.slane %v745, 1
          %v747 = vadd.f32 %v745, %v746
          %v748 = vadd.f32 %v694, %v747
          %749 = vst.msk [vmem:[#allocation3] sm:$0x1] %vm692, %v748
          %750 = vst [vmem:[%s285] sm:$0x1] 0.0
        $region52: #{tpu_custom_call.1} parent=47 // pred_fallthru
          _
        %p751 = scmp.eq.s32.totalorder %s27, 1
        // Predicated region
        $region57: #{tpu_custom_call.1} parent=47 // pred_check
          %p752 = pneg %p751
        $region58: #{tpu_custom_call.1} parent=47 // pred_check_branch
          %754 = sbr.rel (%p752) target = $region60
        $region59: #{tpu_custom_call.1} parent=47 // pred_region
          %v755 = vld [vmem:[#allocation2] sm:$0x1]
          %v756 = vmul.f32 %v755, 0.00390625
          %v757 = vld [vmem:[#allocation3] sm:$0x1]
          %v758 = vmul.f32 %v757, 0.00390625
          %v759 = vmul.f32 %v756, %v756
          %v760 = vsub.f32 %v758, %v759
          %v761 = vadd.f32 %v760, 1e-05
          %v762 = vrsqrt.pop %v761
          %v763 = vld [vmem:[%s3] sm:$0x1]
          %v764 = vld [vmem:[%s5] sm:$0x1]
          %v765 = vmul.f32 %v762, %v763
          %v766 = vmul.f32 %v765, %v764
          %v767 = vld [vmem:[%s4] sm:$0x1]
          %v768 = vmul.f32 %v756, %v762
          %v769 = vmul.f32 %v768, %v763
          %v770 = vsub.f32 %v767, %v769
          %v771 = vmul.f32 %v770, %v764
          %vm772 = vcmask 516096
          %v773 = vsel %vm772, %v771, 0.0
          %774 = vadd.xlane.f32.xlu0 %v773
          %v775 = vpop.xlane.xlu0 %774
          %v776 = vld [vmem:[#allocation4] sm:$0x1]
          %v777 = vadd.f32 %v775, %v776
          %779 = vset.pattern.permute.xlu0 0
          %780 = vperm.xlu0 %779, %v777
          %v781 = vpop.permute.xlu0 %780
          %vm783 = vcmask 523264
          %v785 = vsel %vm783, %v766, 0
          %v788 = vsel %vm783, %v526, 0
          %v791 = vsel %vm783, %v527, 0
          %v794 = vsel %vm783, %v528, 0
          %v797 = vsel %vm783, %v529, 0
          %v800 = vsel %vm783, %v530, 0
          %v803 = vsel %vm783, %v531, 0
          %v806 = vsel %vm783, %v532, 0
          %v809 = vsel %vm783, %v533, 0
          %v812 = vsel %vm783, %v534, 0
          %v815 = vsel %vm783, %v535, 0
          %v818 = vsel %vm783, %v536, 0
          %v821 = vsel %vm783, %v537, 0
          %v824 = vsel %vm783, %v538, 0
          %v827 = vsel %vm783, %v539, 0
          %v830 = vsel %vm783, %v540, 0
          %v833 = vsel %vm783, %v541, 0
          %835 = vmatprep.subr.mxu0 0.0
          %836 = vmatpush1.xpose.msra.mxu0 %v788
          %837 = vmatprep.subr.mxu0 0.0
          %838 = vmatpush1.xpose.msra.mxu0 %v791
          %839 = vmatprep.subr.mxu0 0.0
          %840 = vmatpush1.xpose.msra.mxu0 %v794
          %841 = vmatprep.subr.mxu0 0.0
          %842 = vmatpush1.xpose.msra.mxu0 %v797
          %843 = vmatprep.subr.mxu0 0.0
          %844 = vmatpush1.xpose.msra.mxu0 %v800
          %845 = vmatprep.subr.mxu0 0.0
          %846 = vmatpush1.xpose.msra.mxu0 %v803
          %847 = vmatprep.subr.mxu0 0.0
          %848 = vmatpush1.xpose.msra.mxu0 %v806
          %849 = vmatprep.subr.mxu0 0.0
          %850 = vmatpush1.xpose.msra.mxu0 %v809
          %851 = vmatprep.subr.mxu0 0.0
          %852 = vmatpush1.xpose.msra.mxu0 %v812
          %853 = vmatprep.subr.mxu0 0.0
          %854 = vmatpush1.xpose.msra.mxu0 %v815
          %855 = vmatprep.subr.mxu0 0.0
          %856 = vmatpush1.xpose.msra.mxu0 %v818
          %857 = vmatprep.subr.mxu0 0.0
          %858 = vmatpush1.xpose.msra.mxu0 %v821
          %859 = vmatprep.subr.mxu0 0.0
          %860 = vmatpush1.xpose.msra.mxu0 %v824
          %861 = vmatprep.subr.mxu0 0.0
          %862 = vmatpush1.xpose.msra.mxu0 %v827
          %863 = vmatprep.subr.mxu0 0.0
          %864 = vmatpush1.xpose.msra.mxu0 %v830
          %865 = vmatprep.subr.mxu0 0.0
          %866 = vmatpush1.xpose.msra.mxu0 %v833
          %867 = vmatprep.subr.mxu0 0.0
          %868 = vmatpush1.xpose.msra.mxu0 0.0
          %869 = vmatprep.subr.mxu0 0.0
          %870 = vmatpush1.xpose.msra.mxu0 0.0
          %871 = vmatprep.subr.mxu0 0.0
          %872 = vmatpush1.xpose.msra.mxu0 0.0
          %873 = vmatprep.subr.mxu0 0.0
          %874 = vmatpush1.xpose.msra.mxu0 0.0
          %875 = vmatprep.subr.mxu0 0.0
          %876 = vmatpush1.xpose.msra.mxu0 0.0
          %877 = vmatprep.subr.mxu0 0.0
          %878 = vmatpush1.xpose.msra.mxu0 0.0
          %879 = vmatprep.subr.mxu0 0.0
          %880 = vmatpush1.xpose.msra.mxu0 0.0
          %881 = vmatprep.subr.mxu0 0.0
          %882 = vmatpush1.xpose.msra.mxu0 0.0
          %883 = vmatprep.subr.mxu0 0.0
          %884 = vmatpush1.xpose.msra.mxu0 0.0
          %885 = vmatprep.subr.mxu0 0.0
          %886 = vmatpush1.xpose.msra.mxu0 0.0
          %887 = vmatprep.subr.mxu0 0.0
          %888 = vmatpush1.xpose.msra.mxu0 0.0
          %889 = vmatprep.subr.mxu0 0.0
          %890 = vmatpush1.xpose.msra.mxu0 0.0
          %891 = vmatprep.subr.mxu0 0.0
          %892 = vmatpush1.xpose.msra.mxu0 0.0
          %893 = vmatprep.subr.mxu0 0.0
          %894 = vmatpush1.xpose.msra.mxu0 0.0
          %895 = vmatprep.subr.mxu0 0.0
          %896 = vmatpush1.xpose.msra.mxu0 0.0
          %897 = vmatprep.subr.mxu0 0.0
          %898 = vmatpush1.xpose.msra.mxu0 0.0
          %899 = vmatprep.mubr.f32.mxu0 0.0
          %900 = vmatmul.mubr.f32.gmra.mrb[0].mxu0 %v785
          %v901 = vpop.f32.mrb[0].mxu0
          %v902 = vadd.f32 %v781, %v901
          %v903 = vpop.f32.mrb[0].mxu0
          %904 = vdwg.mxu0
          %905 = vst [vmem:[%s285] sm:$0x1] %v902
        $region60: #{tpu_custom_call.1} parent=47 // pred_fallthru
          _
        %s906 = sand.u32 %s195, 1
        %s907 = scalar_lea.sflag [#allocation6], %s906
        %s908 = sand.u32 %s195, 1
        %s909 = scalar_lea.vmem [#allocation5], %s908
        // Predicated region
        $region61: #{tpu_custom_call.1} parent=47 // pred_check
          %p910 = pneg %p205
        $region62: #{tpu_custom_call.1} parent=47 // pred_check_branch
          %912 = sbr.rel (%p910) target = $region64
        $region63: #{tpu_custom_call.1} parent=47 // pred_region
          %s914 = ssub.s32 16, 16
          %915 = vsyncadd %s907, %s914
          %s916 = smul.addr %s28, 16
          %s917 = scalar_lea.hbm %s7, %s916
          %s919 = sshll.u32 %s909, 4
          %s920 = int_to_ptr.vmem [resolvable:$true] %s919
          %922 = dma.vmem_to_hbm [thread:$0]  %s920, 16, %s917, %s907
        $region64: #{tpu_custom_call.1} parent=47 // pred_fallthru
          _
      $region48: #{tpu_custom_call.1} parent=5 // pred_fallthru
        _
      %p923 = scmp.le.s32.totalorder 2, %s18
      // Predicated region
      $region65: #{tpu_custom_call.1} parent=5 // pred_check
        %p924 = pneg %p923
      $region66: #{tpu_custom_call.1} parent=5 // pred_check_branch
        %926 = sbr.rel (%p924) target = $region68
      $region67: #{tpu_custom_call.1} parent=5 // pred_region
        %s927 = ssub.s32 %s18, 2
        // Predicated region
        $region69: #{tpu_custom_call.1} parent=67 // pred_check
          %p928 = pneg %p211
        $region70: #{tpu_custom_call.1} parent=67 // pred_check_branch
          %930 = sbr.rel (%p928) target = $region72
        $region71: #{tpu_custom_call.1} parent=67 // pred_region
          %s931 = sand.u32 %s196, 1
          %s932 = scalar_lea.sflag [#allocation6], %s931
          %s933 = sand.u32 %s196, 1
          %s934 = scalar_lea.vmem [#allocation5], %s933
          %935 = dma.done %s932, 16
        $region72: #{tpu_custom_call.1} parent=67 // pred_fallthru
          _
      $region68: #{tpu_custom_call.1} parent=5 // pred_fallthru
        _
    $region6: #{tpu_custom_call.1} parent=1 // loop_footer
      %s22 = sadd.s32 1, %s18
    $region7: #{tpu_custom_call.1} parent=1 // loop_footer_branch
      %17 = sbr.rel target = $region3
    $region8: #{tpu_custom_call.1} parent=1 // loop_exit
      _
    %936 = vsyncpa [#allocation6], 1
    %s937 = scalar_lea.sflag [#allocation6], 1
    %938 = vsyncpa %s937, 1

</llo_original>
